<compile_context>
chip_gen: v5e
topology: v5e:2x2
jax: 0.10.0
libtpu: 0.0.40
codegen_flags: <defaults>
</compile_context>

<pallas_src>
import functools

import jax
import jax.numpy as jnp
from jax.experimental import pallas as pl
from jax.experimental.pallas import tpu as pltpu


def _round_up(x: int, m: int) -> int:
    return (x + m - 1) // m * m


def cnn_kernel(x_ref, w_ref, b_ref, o_ref, *, l_out: int, f_pad: int):
    """One lane-dense MXU matmul (block-Toeplitz conv) + max-over-time + bias + ReLU.

    x_ref: (Bt, C*m_word)           flattened NCW input rows (lane-dense)
    w_ref: (C*m_word, l_out*f_pad)  block-Toeplitz conv weight (zeros encode padding)
    b_ref: (1, f_pad)               bias, zero-padded to 128 lanes
    o_ref: (Bt, f_pad)              output word embeddings (single lane-dense store)
    """
    acc = jnp.dot(x_ref[...], w_ref[...],
                  preferred_element_type=jnp.float32)          # (Bt, l_out*f_pad)

    # Max over the l_out conv positions via 128-aligned lane-tile slices (no relayout).
    m = acc[:, 0:f_pad]
    for t in range(1, l_out):
        m = jnp.maximum(m, acc[:, t * f_pad:(t + 1) * f_pad])

    # Bias + ReLU after the max (bias is constant over t, ReLU is monotone => identical).
    o_ref[...] = jnp.maximum(m + b_ref[...], 0.0)


def _build_toeplitz_weight(weight, m_word: int, l_out: int, padding: int,
                           f_pad: int, dtype):
    """(F, C, K) Conv1d weight -> (C*m_word, l_out*f_pad) block-Toeplitz matrix.

    Column block t holds the taps producing conv output position t; row index is the
    flattened NCW input index c*m_word + s. Out-of-range taps (the conv zero-padding)
    become zero entries, so the input needs no explicit padding or transpose.
    """
    F, C, K = weight.shape
    s = jnp.arange(m_word)[:, None]           # input time index
    t = jnp.arange(l_out)[None, :]            # conv output position
    j = s - t + padding                       # tap index, shape (m_word, l_out)
    valid = ((j >= 0) & (j < K)).astype(weight.dtype)
    jc = jnp.clip(j, 0, K - 1)
    wt = jnp.transpose(weight, (1, 2, 0))     # (C, K, F)
    W = wt[:, jc, :] * valid[None, :, :, None]            # (C, m_word, l_out, F)
    W = jnp.pad(W, ((0, 0), (0, 0), (0, 0), (0, f_pad - F)))
    return W.reshape(C * m_word, l_out * f_pad).astype(dtype)


def cnn_forward(x_reshaped, weight, bias, kernel_size=5, padding=1,
                block_b=512, compute_dtype=jnp.float32):
    """x_reshaped: (B, e_char, m_word) float32 (PyTorch NCW layout).
       weight:     (e_word, e_char, k)  (PyTorch Conv1d layout).
       bias:       (e_word,)
       returns:    (B, e_word) float32
    """
    B, C, m_word = x_reshaped.shape
    F = weight.shape[0]
    K = kernel_size
    L_out = m_word - K + 1 + 2 * padding
    assert L_out >= 1, f"conv output length must be >= 1, got {L_out}"
    F_pad = _round_up(F, 128)
    Kin = C * m_word

    # Consume the NCW layout directly: free contiguous reshape, no transpose, no pad.
    x = x_reshaped.reshape(B, Kin).astype(compute_dtype)
    w = _build_toeplitz_weight(weight, m_word, L_out, padding, F_pad, compute_dtype)
    b = jnp.pad(bias.astype(jnp.float32), (0, F_pad - F)).reshape(1, F_pad)

    # Batch tile: multiple of 8, capped at block_b; pad B so the grid divides evenly.
    Bt = _round_up(min(block_b, _round_up(B, 8)), 8)
    Bp = _round_up(B, Bt)
    if Bp != B:
        x = jnp.pad(x, ((0, Bp - B), (0, 0)))
    grid = (Bp // Bt,)

    kernel = functools.partial(cnn_kernel, l_out=L_out, f_pad=F_pad)
    out = pl.pallas_call(
        kernel,
        out_shape=jax.ShapeDtypeStruct((Bp, F_pad), jnp.float32),
        grid_spec=pltpu.PrefetchScalarGridSpec(
            num_scalar_prefetch=0,
            grid=grid,
            in_specs=[
                pl.BlockSpec((Bt, Kin), lambda i: (i, 0)),             # pipelined rows
                pl.BlockSpec((Kin, L_out * F_pad), lambda i: (0, 0)),  # weight resident
                pl.BlockSpec((1, F_pad), lambda i: (0, 0)),            # bias resident
            ],
            out_specs=pl.BlockSpec((Bt, F_pad), lambda i: (i, 0)),     # lane-dense store
        ),
        compiler_params=pltpu.CompilerParams(
            dimension_semantics=("parallel",)),                        # megacore on v7x
    )(x, w, b)
    return out[:B, :F]


def cnn_reference(x_reshaped, weight, bias, kernel_size=5, padding=1):
    """Pure-JAX reference mirroring torch.nn.Conv1d + clamp(min=0) + MaxPool1d."""
    x_conv = jax.lax.conv_general_dilated(
        x_reshaped.astype(jnp.float32),
        weight.astype(jnp.float32),
        window_strides=(1,),
        padding=[(padding, padding)],
        dimension_numbers=("NCH", "OIH", "NCH"),
    ) + bias.reshape(1, -1, 1)
    return jnp.max(jnp.maximum(x_conv, 0.0), axis=2)


if __name__ == "__main__":
    # Small shapes implied by the module: (batch, e_char, m_word) -> (batch, e_word)
    batch_size = 4
    e_char = 16       # input channels (character embedding size)
    e_word = 32       # num_filters (output word-embedding size)
    m_word = 12       # word length in characters
    k, pad = 5, 1

    key = jax.random.PRNGKey(0)
    kx, kw, kb = jax.random.split(key, 3)

    x = jax.random.normal(kx, (batch_size, e_char, m_word), dtype=jnp.float32)
    # Deterministic synthetic Conv1d parameters (PyTorch layout: (out, in, k)).
    weight = 0.1 * jax.random.normal(kw, (e_word, e_char, k), dtype=jnp.float32)
    bias = 0.1 * jax.random.normal(kb, (e_word,), dtype=jnp.float32)

    out = cnn_forward(x, weight, bias, kernel_size=k, padding=pad)
    out = jax.block_until_ready(out)

    ref = cnn_reference(x, weight, bias, kernel_size=k, padding=pad)
    assert out.shape == (batch_size, e_word), out.shape
    assert jnp.allclose(out, ref, atol=1e-4, rtol=1e-4), "mismatch vs reference"

    print("KERNEL_OK")
</pallas_src>

<mosaic_0001>
module attributes {stable_mosaic.version = 11 : i64} {
  func.func @cnn_kernel(%arg0: i32, %arg1: memref<8x192xf32, #tpu.memory_space<vmem>>, %arg2: memref<192x1280xf32, #tpu.memory_space<vmem>>, %arg3: memref<1x128xf32, #tpu.memory_space<vmem>>, %arg4: memref<8x128xf32, #tpu.memory_space<vmem>>) attributes {dimension_semantics = [#tpu.dimension_semantics<parallel>], iteration_bounds = array<i64: 1>, scalar_prefetch = 0 : i64, scratch_operands = 0 : i64, tpu.core_type = #tpu.core_type<tc>, window_params = [{transform_indices = @transform_0, window_bounds = array<i64: 8, 192>}, {pipeline_mode = #tpu.pipeline_mode<synchronous>, transform_indices = @transform_1, window_bounds = array<i64: 192, 1280>}, {pipeline_mode = #tpu.pipeline_mode<synchronous>, transform_indices = @transform_2, window_bounds = array<i64: 1, 128>}, {transform_indices = @transform_3, window_bounds = array<i64: 8, 128>}]} {
    %c0 = arith.constant 0 : index
    %c0_0 = arith.constant 0 : index
    %0 = vector.load %arg1[%c0, %c0_0] : memref<8x192xf32, #tpu.memory_space<vmem>>, vector<8x192xf32>
    %c0_1 = arith.constant 0 : index
    %c0_2 = arith.constant 0 : index
    %1 = vector.load %arg2[%c0_1, %c0_2] : memref<192x1280xf32, #tpu.memory_space<vmem>>, vector<192x1280xf32>
    %cst = arith.constant dense<0.000000e+00> : vector<8x1280xf32>
    %2 = tpu.matmul %0, %1, %cst {dimension_numbers = #tpu.dot_dimension_numbers<[1], [0], [0], [1], [0, 0, 1, 1], [], []>} : vector<8x192xf32>, vector<192x1280xf32>, vector<8x1280xf32> -> vector<8x1280xf32>
    %3 = vector.extract_strided_slice %2 {offsets = [0, 0], sizes = [8, 128], strides = [1, 1]} : vector<8x1280xf32> to vector<8x128xf32>
    %4 = vector.extract_strided_slice %2 {offsets = [0, 128], sizes = [8, 128], strides = [1, 1]} : vector<8x1280xf32> to vector<8x128xf32>
    %5 = arith.maximumf %3, %4 : vector<8x128xf32>
    %6 = vector.extract_strided_slice %2 {offsets = [0, 256], sizes = [8, 128], strides = [1, 1]} : vector<8x1280xf32> to vector<8x128xf32>
    %7 = arith.maximumf %5, %6 : vector<8x128xf32>
    %8 = vector.extract_strided_slice %2 {offsets = [0, 384], sizes = [8, 128], strides = [1, 1]} : vector<8x1280xf32> to vector<8x128xf32>
    %9 = arith.maximumf %7, %8 : vector<8x128xf32>
    %10 = vector.extract_strided_slice %2 {offsets = [0, 512], sizes = [8, 128], strides = [1, 1]} : vector<8x1280xf32> to vector<8x128xf32>
    %11 = arith.maximumf %9, %10 : vector<8x128xf32>
    %12 = vector.extract_strided_slice %2 {offsets = [0, 640], sizes = [8, 128], strides = [1, 1]} : vector<8x1280xf32> to vector<8x128xf32>
    %13 = arith.maximumf %11, %12 : vector<8x128xf32>
    %14 = vector.extract_strided_slice %2 {offsets = [0, 768], sizes = [8, 128], strides = [1, 1]} : vector<8x1280xf32> to vector<8x128xf32>
    %15 = arith.maximumf %13, %14 : vector<8x128xf32>
    %16 = vector.extract_strided_slice %2 {offsets = [0, 896], sizes = [8, 128], strides = [1, 1]} : vector<8x1280xf32> to vector<8x128xf32>
    %17 = arith.maximumf %15, %16 : vector<8x128xf32>
    %18 = vector.extract_strided_slice %2 {offsets = [0, 1024], sizes = [8, 128], strides = [1, 1]} : vector<8x1280xf32> to vector<8x128xf32>
    %19 = arith.maximumf %17, %18 : vector<8x128xf32>
    %20 = vector.extract_strided_slice %2 {offsets = [0, 1152], sizes = [8, 128], strides = [1, 1]} : vector<8x1280xf32> to vector<8x128xf32>
    %21 = arith.maximumf %19, %20 : vector<8x128xf32>
    %c0_3 = arith.constant 0 : index
    %c0_4 = arith.constant 0 : index
    %22 = vector.load %arg3[%c0_3, %c0_4] : memref<1x128xf32, #tpu.memory_space<vmem>>, vector<1x128xf32>
    %23 = vector.broadcast %22 : vector<1x128xf32> to vector<8x128xf32>
    %24 = arith.addf %21, %23 : vector<8x128xf32>
    %cst_5 = arith.constant 0.000000e+00 : f32
    %25 = vector.broadcast %cst_5 : f32 to vector<8x128xf32>
    %26 = arith.maximumf %24, %25 : vector<8x128xf32>
    %c0_6 = arith.constant 0 : index
    %c0_7 = arith.constant 0 : index
    %27 = vector.load %arg4[%c0_6, %c0_7] : memref<8x128xf32, #tpu.memory_space<vmem>>, vector<8x128xf32>
    tpu.vector_store %arg4[%c0_6, %c0_7], %26 {strides = array<i32>} : memref<8x128xf32, #tpu.memory_space<vmem>>, vector<8x128xf32>,
    return
  }
  func.func @transform_0(%arg0: i32) -> (i32, i32) {
    %c0_i32 = arith.constant 0 : i32
    %c0_i32_0 = arith.constant 0 : i32
    return %arg0, %c0_i32 : i32, i32
  }
  func.func @transform_1(%arg0: i32) -> (i32, i32) {
    %c0_i32 = arith.constant 0 : i32
    %c0_i32_0 = arith.constant 0 : i32
    %c0_i32_1 = arith.constant 0 : i32
    return %c0_i32, %c0_i32_0 : i32, i32
  }
  func.func @transform_2(%arg0: i32) -> (i32, i32) {
    %c0_i32 = arith.constant 0 : i32
    %c0_i32_0 = arith.constant 0 : i32
    %c0_i32_1 = arith.constant 0 : i32
    return %c0_i32, %c0_i32_0 : i32, i32
  }
  func.func @transform_3(%arg0: i32) -> (i32, i32) {
    %c0_i32 = arith.constant 0 : i32
    %c0_i32_0 = arith.constant 0 : i32
    return %arg0, %c0_i32 : i32, i32
  }
}

</mosaic_0001>

<llo_original>
// kernel: tpu_custom_call.1
$region0: #{tpu_custom_call.1}
  #allocation0 [shape = 'u32[]', space=smem, size = 0x4, offset = 0x4, fixed_abs, tag = 'smem constant byte address 0x4 - core index']
  #allocation1 [shape = 'u32[72,128]{1,0:T(1,128)}', space=vmem, size = 0x9000, scoped, tag = 'internal scratch']
  %s0 = inlined_call_operand.hbm [shape: f32[8,192], index: 0, kind: input, shape index: {}]
  %s1 = inlined_call_operand.hbm [shape: f32[192,1280], index: 1, kind: input, shape index: {}]
  %s2 = inlined_call_operand.vmem [shape: f32[1,128], index: 2, kind: input, shape index: {}]
  %s3 = inlined_call_operand.hbm [shape: f32[8,128], index: 3, kind: output, shape index: {}]
  %s4 = sld [smem:[#allocation0]]
  $region30: #{tpu_custom_call.1} parent=0
    _
  %s6 = ssub.s32 1, %s4
  %s7 = scalar_select 0, %s6, %s4
  $region1: #{tpu_custom_call.1} parent=0
    #allocation2 [shape = 'u8[8192]{0}', space=vmem, size = 0x2000, scoped, tag = 'input window, operand 0, single buffered']
    #allocation3 [shape = 's32[1]{0}', space=sflag, size = 0x4, scoped, tag = 'scoped memory for tpu_custom_call.1']
    #allocation4 [shape = 's32[1]{0}', space=sflag, size = 0x4, scoped, tag = 'scoped memory for tpu_custom_call.1']
    #allocation5 [shape = 'u8[983040]{0}', space=vmem, size = 0xf0000, scoped, tag = 'input window, operand 1, single buffered']
    #allocation6 [shape = 's32[1]{0}', space=sflag, size = 0x4, scoped, tag = 'scoped memory for tpu_custom_call.1']
    #allocation7 [shape = 'u8[4096]{0}', space=vmem, size = 0x1000, scoped, tag = 'output window, operand 0, single buffered']
    %8 = vsyncpa [#allocation3], 0
    %9 = vsyncpa [#allocation6], 0
    %10 = vsyncpa [#allocation4], 0
    // Predicated region
    $region2: #{tpu_custom_call.1} parent=1 // pred_check
      _
    $region3: #{tpu_custom_call.1} parent=1 // pred_check_branch
      %12 = sbr.rel (0) target = $region5
    $region4: #{tpu_custom_call.1} parent=1 // pred_region
      %14 = vsyncadd [#allocation3], 0
      %s16 = sshll.u32 %s0, 4
      %s17 = int_to_ptr.hbm [resolvable:$true] %s16
      %s18 = sshll.u32 [#allocation2], 4
      %s19 = int_to_ptr.vmem [resolvable:$true] %s18
      %21 = dma.hbm_to_vmem [thread:$0]  %s17, 256, %s19, [#allocation3]
    $region5: #{tpu_custom_call.1} parent=1 // pred_fallthru
      _
    // Predicated region
    $region6: #{tpu_custom_call.1} parent=1 // pred_check
      _
    $region7: #{tpu_custom_call.1} parent=1 // pred_check_branch
      %23 = sbr.rel (0) target = $region9
    $region8: #{tpu_custom_call.1} parent=1 // pred_region
      %25 = vsyncadd [#allocation6], 0
      %s26 = sshll.u32 %s1, 4
      %s27 = int_to_ptr.hbm [resolvable:$true] %s26
      %s28 = sshll.u32 [#allocation5], 4
      %s29 = int_to_ptr.vmem [resolvable:$true] %s28
      %34 = dma.hbm_to_vmem [thread:$0]  %s27, 30720, %s29, [#allocation6], 1280, 1280, 80
    $region9: #{tpu_custom_call.1} parent=1 // pred_fallthru
      _
    // Predicated region
    $region10: #{tpu_custom_call.1} parent=1 // pred_check
      _
    $region11: #{tpu_custom_call.1} parent=1 // pred_check_branch
      %36 = sbr.rel (0) target = $region13
    $region12: #{tpu_custom_call.1} parent=1 // pred_region
      _
    $region13: #{tpu_custom_call.1} parent=1 // pred_fallthru
      _
    // Predicated region
    $region14: #{tpu_custom_call.1} parent=1 // pred_check
      _
    $region15: #{tpu_custom_call.1} parent=1 // pred_check_branch
      %38 = sbr.rel (0) target = $region17
    $region16: #{tpu_custom_call.1} parent=1 // pred_region
      %40 = dma.done [#allocation3], 256
    $region17: #{tpu_custom_call.1} parent=1 // pred_fallthru
      _
    // Predicated region
    $region18: #{tpu_custom_call.1} parent=1 // pred_check
      _
    $region19: #{tpu_custom_call.1} parent=1 // pred_check_branch
      %42 = sbr.rel (0) target = $region21
    $region20: #{tpu_custom_call.1} parent=1 // pred_region
      %44 = dma.done [#allocation6], 30720
    $region21: #{tpu_custom_call.1} parent=1 // pred_fallthru
      _
    %v45 = vld [vmem:[#allocation2] sm:$0xff]
    %v46 = vld [vmem:[#allocation2 + $0x8] sm:$0xff]
    %v47 = vld [vmem:[#allocation5] sm:$0xff]
    %v48 = vld [vmem:[#allocation5 + $0x8] sm:$0xff]
    %v49 = vld [vmem:[#allocation5 + $0x10] sm:$0xff]
    %v50 = vld [vmem:[#allocation5 + $0x18] sm:$0xff]
    %v51 = vld [vmem:[#allocation5 + $0x20] sm:$0xff]
    %v52 = vld [vmem:[#allocation5 + $0x28] sm:$0xff]
    %v53 = vld [vmem:[#allocation5 + $0x30] sm:$0xff]
    %v54 = vld [vmem:[#allocation5 + $0x38] sm:$0xff]
    %v55 = vld [vmem:[#allocation5 + $0x40] sm:$0xff]
    %v56 = vld [vmem:[#allocation5 + $0x48] sm:$0xff]
    %v57 = vld [vmem:[#allocation5 + $0x50] sm:$0xff]
    %v58 = vld [vmem:[#allocation5 + $0x58] sm:$0xff]
    %v59 = vld [vmem:[#allocation5 + $0x60] sm:$0xff]
    %v60 = vld [vmem:[#allocation5 + $0x68] sm:$0xff]
    %v61 = vld [vmem:[#allocation5 + $0x70] sm:$0xff]
    %v62 = vld [vmem:[#allocation5 + $0x78] sm:$0xff]
    %v63 = vld [vmem:[#allocation5 + $0x80] sm:$0xff]
    %v64 = vld [vmem:[#allocation5 + $0x88] sm:$0xff]
    %v65 = vld [vmem:[#allocation5 + $0x90] sm:$0xff]
    %v66 = vld [vmem:[#allocation5 + $0x98] sm:$0xff]
    %v67 = vld [vmem:[#allocation5 + $0xa0] sm:$0xff]
    %v68 = vld [vmem:[#allocation5 + $0xa8] sm:$0xff]
    %v69 = vld [vmem:[#allocation5 + $0xb0] sm:$0xff]
    %v70 = vld [vmem:[#allocation5 + $0xb8] sm:$0xff]
    %v71 = vld [vmem:[#allocation5 + $0xc0] sm:$0xff]
    %v72 = vld [vmem:[#allocation5 + $0xc8] sm:$0xff]
    %v73 = vld [vmem:[#allocation5 + $0xd0] sm:$0xff]
    %v74 = vld [vmem:[#allocation5 + $0xd8] sm:$0xff]
    %v75 = vld [vmem:[#allocation5 + $0xe0] sm:$0xff]
    %v76 = vld [vmem:[#allocation5 + $0xe8] sm:$0xff]
    %v77 = vld [vmem:[#allocation5 + $0xf0] sm:$0xff]
    %v78 = vld [vmem:[#allocation5 + $0xf8] sm:$0xff]
    %v79 = vld [vmem:[#allocation5 + $0x100] sm:$0xff]
    %v80 = vld [vmem:[#allocation5 + $0x108] sm:$0xff]
    %v81 = vld [vmem:[#allocation5 + $0x110] sm:$0xff]
    %v82 = vld [vmem:[#allocation5 + $0x118] sm:$0xff]
    %v83 = vld [vmem:[#allocation5 + $0x120] sm:$0xff]
    %v84 = vld [vmem:[#allocation5 + $0x128] sm:$0xff]
    %v85 = vld [vmem:[#allocation5 + $0x130] sm:$0xff]
    %v86 = vld [vmem:[#allocation5 + $0x138] sm:$0xff]
    %v87 = vld [vmem:[#allocation5 + $0x140] sm:$0xff]
    %v88 = vld [vmem:[#allocation5 + $0x148] sm:$0xff]
    %v89 = vld [vmem:[#allocation5 + $0x150] sm:$0xff]
    %v90 = vld [vmem:[#allocation5 + $0x158] sm:$0xff]
    %v91 = vld [vmem:[#allocation5 + $0x160] sm:$0xff]
    %v92 = vld [vmem:[#allocation5 + $0x168] sm:$0xff]
    %v93 = vld [vmem:[#allocation5 + $0x170] sm:$0xff]
    %v94 = vld [vmem:[#allocation5 + $0x178] sm:$0xff]
    %v95 = vld [vmem:[#allocation5 + $0x180] sm:$0xff]
    %v96 = vld [vmem:[#allocation5 + $0x188] sm:$0xff]
    %v97 = vld [vmem:[#allocation5 + $0x190] sm:$0xff]
    %v98 = vld [vmem:[#allocation5 + $0x198] sm:$0xff]
    %v99 = vld [vmem:[#allocation5 + $0x1a0] sm:$0xff]
    %v100 = vld [vmem:[#allocation5 + $0x1a8] sm:$0xff]
    %v101 = vld [vmem:[#allocation5 + $0x1b0] sm:$0xff]
    %v102 = vld [vmem:[#allocation5 + $0x1b8] sm:$0xff]
    %v103 = vld [vmem:[#allocation5 + $0x1c0] sm:$0xff]
    %v104 = vld [vmem:[#allocation5 + $0x1c8] sm:$0xff]
    %v105 = vld [vmem:[#allocation5 + $0x1d0] sm:$0xff]
    %v106 = vld [vmem:[#allocation5 + $0x1d8] sm:$0xff]
    %v107 = vld [vmem:[#allocation5 + $0x1e0] sm:$0xff]
    %v108 = vld [vmem:[#allocation5 + $0x1e8] sm:$0xff]
    %v109 = vld [vmem:[#allocation5 + $0x1f0] sm:$0xff]
    %v110 = vld [vmem:[#allocation5 + $0x1f8] sm:$0xff]
    %v111 = vld [vmem:[#allocation5 + $0x200] sm:$0xff]
    %v112 = vld [vmem:[#allocation5 + $0x208] sm:$0xff]
    %v113 = vld [vmem:[#allocation5 + $0x210] sm:$0xff]
    %v114 = vld [vmem:[#allocation5 + $0x218] sm:$0xff]
    %v115 = vld [vmem:[#allocation5 + $0x220] sm:$0xff]
    %v116 = vld [vmem:[#allocation5 + $0x228] sm:$0xff]
    %v117 = vld [vmem:[#allocation5 + $0x230] sm:$0xff]
    %v118 = vld [vmem:[#allocation5 + $0x238] sm:$0xff]
    %v119 = vld [vmem:[#allocation5 + $0x240] sm:$0xff]
    %v120 = vld [vmem:[#allocation5 + $0x248] sm:$0xff]
    %v121 = vld [vmem:[#allocation5 + $0x250] sm:$0xff]
    %v122 = vld [vmem:[#allocation5 + $0x258] sm:$0xff]
    %v123 = vld [vmem:[#allocation5 + $0x260] sm:$0xff]
    %v124 = vld [vmem:[#allocation5 + $0x268] sm:$0xff]
    %v125 = vld [vmem:[#allocation5 + $0x270] sm:$0xff]
    %v126 = vld [vmem:[#allocation5 + $0x278] sm:$0xff]
    %v127 = vld [vmem:[#allocation5 + $0x280] sm:$0xff]
    %v128 = vld [vmem:[#allocation5 + $0x288] sm:$0xff]
    %v129 = vld [vmem:[#allocation5 + $0x290] sm:$0xff]
    %v130 = vld [vmem:[#allocation5 + $0x298] sm:$0xff]
    %v131 = vld [vmem:[#allocation5 + $0x2a0] sm:$0xff]
    %v132 = vld [vmem:[#allocation5 + $0x2a8] sm:$0xff]
    %v133 = vld [vmem:[#allocation5 + $0x2b0] sm:$0xff]
    %v134 = vld [vmem:[#allocation5 + $0x2b8] sm:$0xff]
    %v135 = vld [vmem:[#allocation5 + $0x2c0] sm:$0xff]
    %v136 = vld [vmem:[#allocation5 + $0x2c8] sm:$0xff]
    %v137 = vld [vmem:[#allocation5 + $0x2d0] sm:$0xff]
    %v138 = vld [vmem:[#allocation5 + $0x2d8] sm:$0xff]
    %v139 = vld [vmem:[#allocation5 + $0x2e0] sm:$0xff]
    %v140 = vld [vmem:[#allocation5 + $0x2e8] sm:$0xff]
    %v141 = vld [vmem:[#allocation5 + $0x2f0] sm:$0xff]
    %v142 = vld [vmem:[#allocation5 + $0x2f8] sm:$0xff]
    %v143 = vld [vmem:[#allocation5 + $0x300] sm:$0xff]
    %v144 = vld [vmem:[#allocation5 + $0x308] sm:$0xff]
    %v145 = vld [vmem:[#allocation5 + $0x310] sm:$0xff]
    %v146 = vld [vmem:[#allocation5 + $0x318] sm:$0xff]
    %v147 = vld [vmem:[#allocation5 + $0x320] sm:$0xff]
    %v148 = vld [vmem:[#allocation5 + $0x328] sm:$0xff]
    %v149 = vld [vmem:[#allocation5 + $0x330] sm:$0xff]
    %v150 = vld [vmem:[#allocation5 + $0x338] sm:$0xff]
    %v151 = vld [vmem:[#allocation5 + $0x340] sm:$0xff]
    %v152 = vld [vmem:[#allocation5 + $0x348] sm:$0xff]
    %v153 = vld [vmem:[#allocation5 + $0x350] sm:$0xff]
    %v154 = vld [vmem:[#allocation5 + $0x358] sm:$0xff]
    %v155 = vld [vmem:[#allocation5 + $0x360] sm:$0xff]
    %v156 = vld [vmem:[#allocation5 + $0x368] sm:$0xff]
    %v157 = vld [vmem:[#allocation5 + $0x370] sm:$0xff]
    %v158 = vld [vmem:[#allocation5 + $0x378] sm:$0xff]
    %v159 = vld [vmem:[#allocation5 + $0x380] sm:$0xff]
    %v160 = vld [vmem:[#allocation5 + $0x388] sm:$0xff]
    %v161 = vld [vmem:[#allocation5 + $0x390] sm:$0xff]
    %v162 = vld [vmem:[#allocation5 + $0x398] sm:$0xff]
    %v163 = vld [vmem:[#allocation5 + $0x3a0] sm:$0xff]
    %v164 = vld [vmem:[#allocation5 + $0x3a8] sm:$0xff]
    %v165 = vld [vmem:[#allocation5 + $0x3b0] sm:$0xff]
    %v166 = vld [vmem:[#allocation5 + $0x3b8] sm:$0xff]
    %v167 = vld [vmem:[#allocation5 + $0x3c0] sm:$0xff]
    %v168 = vld [vmem:[#allocation5 + $0x3c8] sm:$0xff]
    %v169 = vld [vmem:[#allocation5 + $0x3d0] sm:$0xff]
    %v170 = vld [vmem:[#allocation5 + $0x3d8] sm:$0xff]
    %v171 = vld [vmem:[#allocation5 + $0x3e0] sm:$0xff]
    %v172 = vld [vmem:[#allocation5 + $0x3e8] sm:$0xff]
    %v173 = vld [vmem:[#allocation5 + $0x3f0] sm:$0xff]
    %v174 = vld [vmem:[#allocation5 + $0x3f8] sm:$0xff]
    %v175 = vld [vmem:[#allocation5 + $0x400] sm:$0xff]
    %v176 = vld [vmem:[#allocation5 + $0x408] sm:$0xff]
    %v177 = vld [vmem:[#allocation5 + $0x410] sm:$0xff]
    %v178 = vld [vmem:[#allocation5 + $0x418] sm:$0xff]
    %v179 = vld [vmem:[#allocation5 + $0x420] sm:$0xff]
    %v180 = vld [vmem:[#allocation5 + $0x428] sm:$0xff]
    %v181 = vld [vmem:[#allocation5 + $0x430] sm:$0xff]
    %v182 = vld [vmem:[#allocation5 + $0x438] sm:$0xff]
    %v183 = vld [vmem:[#allocation5 + $0x440] sm:$0xff]
    %v184 = vld [vmem:[#allocation5 + $0x448] sm:$0xff]
    %v185 = vld [vmem:[#allocation5 + $0x450] sm:$0xff]
    %v186 = vld [vmem:[#allocation5 + $0x458] sm:$0xff]
    %v187 = vld [vmem:[#allocation5 + $0x460] sm:$0xff]
    %v188 = vld [vmem:[#allocation5 + $0x468] sm:$0xff]
    %v189 = vld [vmem:[#allocation5 + $0x470] sm:$0xff]
    %v190 = vld [vmem:[#allocation5 + $0x478] sm:$0xff]
    %v191 = vld [vmem:[#allocation5 + $0x480] sm:$0xff]
    %v192 = vld [vmem:[#allocation5 + $0x488] sm:$0xff]
    %v193 = vld [vmem:[#allocation5 + $0x490] sm:$0xff]
    %v194 = vld [vmem:[#allocation5 + $0x498] sm:$0xff]
    %v195 = vld [vmem:[#allocation5 + $0x4a0] sm:$0xff]
    %v196 = vld [vmem:[#allocation5 + $0x4a8] sm:$0xff]
    %v197 = vld [vmem:[#allocation5 + $0x4b0] sm:$0xff]
    %v198 = vld [vmem:[#allocation5 + $0x4b8] sm:$0xff]
    %v199 = vld [vmem:[#allocation5 + $0x4c0] sm:$0xff]
    %v200 = vld [vmem:[#allocation5 + $0x4c8] sm:$0xff]
    %v201 = vld [vmem:[#allocation5 + $0x4d0] sm:$0xff]
    %v202 = vld [vmem:[#allocation5 + $0x4d8] sm:$0xff]
    %v203 = vld [vmem:[#allocation5 + $0x4e0] sm:$0xff]
    %v204 = vld [vmem:[#allocation5 + $0x4e8] sm:$0xff]
    %v205 = vld [vmem:[#allocation5 + $0x4f0] sm:$0xff]
    %v206 = vld [vmem:[#allocation5 + $0x4f8] sm:$0xff]
    %v207 = vld [vmem:[#allocation5 + $0x500] sm:$0xff]
    %v208 = vld [vmem:[#allocation5 + $0x508] sm:$0xff]
    %v209 = vld [vmem:[#allocation5 + $0x510] sm:$0xff]
    %v210 = vld [vmem:[#allocation5 + $0x518] sm:$0xff]
    %v211 = vld [vmem:[#allocation5 + $0x520] sm:$0xff]
    %v212 = vld [vmem:[#allocation5 + $0x528] sm:$0xff]
    %v213 = vld [vmem:[#allocation5 + $0x530] sm:$0xff]
    %v214 = vld [vmem:[#allocation5 + $0x538] sm:$0xff]
    %v215 = vld [vmem:[#allocation5 + $0x540] sm:$0xff]
    %v216 = vld [vmem:[#allocation5 + $0x548] sm:$0xff]
    %v217 = vld [vmem:[#allocation5 + $0x550] sm:$0xff]
    %v218 = vld [vmem:[#allocation5 + $0x558] sm:$0xff]
    %v219 = vld [vmem:[#allocation5 + $0x560] sm:$0xff]
    %v220 = vld [vmem:[#allocation5 + $0x568] sm:$0xff]
    %v221 = vld [vmem:[#allocation5 + $0x570] sm:$0xff]
    %v222 = vld [vmem:[#allocation5 + $0x578] sm:$0xff]
    %v223 = vld [vmem:[#allocation5 + $0x580] sm:$0xff]
    %v224 = vld [vmem:[#allocation5 + $0x588] sm:$0xff]
    %v225 = vld [vmem:[#allocation5 + $0x590] sm:$0xff]
    %v226 = vld [vmem:[#allocation5 + $0x598] sm:$0xff]
    %v227 = vld [vmem:[#allocation5 + $0x5a0] sm:$0xff]
    %v228 = vld [vmem:[#allocation5 + $0x5a8] sm:$0xff]
    %v229 = vld [vmem:[#allocation5 + $0x5b0] sm:$0xff]
    %v230 = vld [vmem:[#allocation5 + $0x5b8] sm:$0xff]
    %v231 = vld [vmem:[#allocation5 + $0x5c0] sm:$0xff]
    %v232 = vld [vmem:[#allocation5 + $0x5c8] sm:$0xff]
    %v233 = vld [vmem:[#allocation5 + $0x5d0] sm:$0xff]
    %v234 = vld [vmem:[#allocation5 + $0x5d8] sm:$0xff]
    %v235 = vld [vmem:[#allocation5 + $0x5e0] sm:$0xff]
    %v236 = vld [vmem:[#allocation5 + $0x5e8] sm:$0xff]
    %v237 = vld [vmem:[#allocation5 + $0x5f0] sm:$0xff]
    %v238 = vld [vmem:[#allocation5 + $0x5f8] sm:$0xff]
    %v239 = vld [vmem:[#allocation5 + $0x600] sm:$0xff]
    %v240 = vld [vmem:[#allocation5 + $0x608] sm:$0xff]
    %v241 = vld [vmem:[#allocation5 + $0x610] sm:$0xff]
    %v242 = vld [vmem:[#allocation5 + $0x618] sm:$0xff]
    %v243 = vld [vmem:[#allocation5 + $0x620] sm:$0xff]
    %v244 = vld [vmem:[#allocation5 + $0x628] sm:$0xff]
    %v245 = vld [vmem:[#allocation5 + $0x630] sm:$0xff]
    %v246 = vld [vmem:[#allocation5 + $0x638] sm:$0xff]
    %v247 = vld [vmem:[#allocation5 + $0x640] sm:$0xff]
    %v248 = vld [vmem:[#allocation5 + $0x648] sm:$0xff]
    %v249 = vld [vmem:[#allocation5 + $0x650] sm:$0xff]
    %v250 = vld [vmem:[#allocation5 + $0x658] sm:$0xff]
    %v251 = vld [vmem:[#allocation5 + $0x660] sm:$0xff]
    %v252 = vld [vmem:[#allocation5 + $0x668] sm:$0xff]
    %v253 = vld [vmem:[#allocation5 + $0x670] sm:$0xff]
    %v254 = vld [vmem:[#allocation5 + $0x678] sm:$0xff]
    %v255 = vld [vmem:[#allocation5 + $0x680] sm:$0xff]
    %v256 = vld [vmem:[#allocation5 + $0x688] sm:$0xff]
    %v257 = vld [vmem:[#allocation5 + $0x690] sm:$0xff]
    %v258 = vld [vmem:[#allocation5 + $0x698] sm:$0xff]
    %v259 = vld [vmem:[#allocation5 + $0x6a0] sm:$0xff]
    %v260 = vld [vmem:[#allocation5 + $0x6a8] sm:$0xff]
    %v261 = vld [vmem:[#allocation5 + $0x6b0] sm:$0xff]
    %v262 = vld [vmem:[#allocation5 + $0x6b8] sm:$0xff]
    %v263 = vld [vmem:[#allocation5 + $0x6c0] sm:$0xff]
    %v264 = vld [vmem:[#allocation5 + $0x6c8] sm:$0xff]
    %v265 = vld [vmem:[#allocation5 + $0x6d0] sm:$0xff]
    %v266 = vld [vmem:[#allocation5 + $0x6d8] sm:$0xff]
    %v267 = vld [vmem:[#allocation5 + $0x6e0] sm:$0xff]
    %v268 = vld [vmem:[#allocation5 + $0x6e8] sm:$0xff]
    %v269 = vld [vmem:[#allocation5 + $0x6f0] sm:$0xff]
    %v270 = vld [vmem:[#allocation5 + $0x6f8] sm:$0xff]
    %v271 = vld [vmem:[#allocation5 + $0x700] sm:$0xff]
    %v272 = vld [vmem:[#allocation5 + $0x708] sm:$0xff]
    %v273 = vld [vmem:[#allocation5 + $0x710] sm:$0xff]
    %v274 = vld [vmem:[#allocation5 + $0x718] sm:$0xff]
    %v275 = vld [vmem:[#allocation5 + $0x720] sm:$0xff]
    %v276 = vld [vmem:[#allocation5 + $0x728] sm:$0xff]
    %v277 = vld [vmem:[#allocation5 + $0x730] sm:$0xff]
    %v278 = vld [vmem:[#allocation5 + $0x738] sm:$0xff]
    %v279 = vld [vmem:[#allocation5 + $0x740] sm:$0xff]
    %v280 = vld [vmem:[#allocation5 + $0x748] sm:$0xff]
    %v281 = vld [vmem:[#allocation5 + $0x750] sm:$0xff]
    %v282 = vld [vmem:[#allocation5 + $0x758] sm:$0xff]
    %v283 = vld [vmem:[#allocation5 + $0x760] sm:$0xff]
    %v284 = vld [vmem:[#allocation5 + $0x768] sm:$0xff]
    %v285 = vld [vmem:[#allocation5 + $0x770] sm:$0xff]
    %v286 = vld [vmem:[#allocation5 + $0x778] sm:$0xff]
    %vm287 = vcmask 523264
    %v289 = vsel %vm287, %v46, 0
    %291 = vmatpush.msra.mxu0 %v197
    %292 = vmatpush.msra.mxu0 %v187
    %293 = vmatpush.msra.mxu0 %v177
    %294 = vmatpush.msra.mxu0 %v167
    %295 = vmatpush.msra.mxu0 %v157
    %296 = vmatpush.msra.mxu0 %v147
    %297 = vmatpush.msra.mxu0 %v137
    %298 = vmatpush.msra.mxu0 %v127
    %299 = vmatpush.msra.mxu0 %v117
    %300 = vmatpush.msra.mxu0 %v107
    %301 = vmatpush.msra.mxu0 %v97
    %302 = vmatpush.msra.mxu0 %v87
    %303 = vmatpush.msra.mxu0 %v77
    %304 = vmatpush.msra.mxu0 %v67
    %305 = vmatpush.msra.mxu0 %v57
    %306 = vmatpush.msra.mxu0 %v47
    %307 = vmatmul.f32.gmra.mxu0 %v45
    %v308 = vpop.f32.mrf.mxu0
    %v309 = vadd.f32 0.0, %v308
    %310 = vdwg.mxu0
    %311 = vmatpush.msra.mxu0 0.0
    %312 = vmatpush.msra.mxu0 0.0
    %313 = vmatpush.msra.mxu0 0.0
    %314 = vmatpush.msra.mxu0 0.0
    %315 = vmatpush.msra.mxu0 0.0
    %316 = vmatpush.msra.mxu0 0.0
    %317 = vmatpush.msra.mxu0 0.0
    %318 = vmatpush.msra.mxu0 0.0
    %319 = vmatpush.msra.mxu0 %v277
    %320 = vmatpush.msra.mxu0 %v267
    %321 = vmatpush.msra.mxu0 %v257
    %322 = vmatpush.msra.mxu0 %v247
    %323 = vmatpush.msra.mxu0 %v237
    %324 = vmatpush.msra.mxu0 %v227
    %325 = vmatpush.msra.mxu0 %v217
    %326 = vmatpush.msra.mxu0 %v207
    %327 = vmatmul.f32.gmra.mxu0 %v289
    %v328 = vpop.f32.mrf.mxu0
    %v329 = vadd.f32 %v309, %v328
    %330 = vdwg.mxu0
    %331 = vmatpush.msra.mxu0 %v198
    %332 = vmatpush.msra.mxu0 %v188
    %333 = vmatpush.msra.mxu0 %v178
    %334 = vmatpush.msra.mxu0 %v168
    %335 = vmatpush.msra.mxu0 %v158
    %336 = vmatpush.msra.mxu0 %v148
    %337 = vmatpush.msra.mxu0 %v138
    %338 = vmatpush.msra.mxu0 %v128
    %339 = vmatpush.msra.mxu0 %v118
    %340 = vmatpush.msra.mxu0 %v108
    %341 = vmatpush.msra.mxu0 %v98
    %342 = vmatpush.msra.mxu0 %v88
    %343 = vmatpush.msra.mxu0 %v78
    %344 = vmatpush.msra.mxu0 %v68
    %345 = vmatpush.msra.mxu0 %v58
    %346 = vmatpush.msra.mxu0 %v48
    %347 = vmatmul.f32.gmra.mxu0 %v45
    %v348 = vpop.f32.mrf.mxu0
    %v349 = vadd.f32 0.0, %v348
    %350 = vdwg.mxu0
    %351 = vmatpush.msra.mxu0 0.0
    %352 = vmatpush.msra.mxu0 0.0
    %353 = vmatpush.msra.mxu0 0.0
    %354 = vmatpush.msra.mxu0 0.0
    %355 = vmatpush.msra.mxu0 0.0
    %356 = vmatpush.msra.mxu0 0.0
    %357 = vmatpush.msra.mxu0 0.0
    %358 = vmatpush.msra.mxu0 0.0
    %359 = vmatpush.msra.mxu0 %v278
    %360 = vmatpush.msra.mxu0 %v268
    %361 = vmatpush.msra.mxu0 %v258
    %362 = vmatpush.msra.mxu0 %v248
    %363 = vmatpush.msra.mxu0 %v238
    %364 = vmatpush.msra.mxu0 %v228
    %365 = vmatpush.msra.mxu0 %v218
    %366 = vmatpush.msra.mxu0 %v208
    %367 = vmatmul.f32.gmra.mxu0 %v289
    %v368 = vpop.f32.mrf.mxu0
    %v369 = vadd.f32 %v349, %v368
    %370 = vdwg.mxu0
    %371 = vmatpush.msra.mxu0 %v199
    %372 = vmatpush.msra.mxu0 %v189
    %373 = vmatpush.msra.mxu0 %v179
    %374 = vmatpush.msra.mxu0 %v169
    %375 = vmatpush.msra.mxu0 %v159
    %376 = vmatpush.msra.mxu0 %v149
    %377 = vmatpush.msra.mxu0 %v139
    %378 = vmatpush.msra.mxu0 %v129
    %379 = vmatpush.msra.mxu0 %v119
    %380 = vmatpush.msra.mxu0 %v109
    %381 = vmatpush.msra.mxu0 %v99
    %382 = vmatpush.msra.mxu0 %v89
    %383 = vmatpush.msra.mxu0 %v79
    %384 = vmatpush.msra.mxu0 %v69
    %385 = vmatpush.msra.mxu0 %v59
    %386 = vmatpush.msra.mxu0 %v49
    %387 = vmatmul.f32.gmra.mxu0 %v45
    %v388 = vpop.f32.mrf.mxu0
    %v389 = vadd.f32 0.0, %v388
    %390 = vdwg.mxu0
    %391 = vmatpush.msra.mxu0 0.0
    %392 = vmatpush.msra.mxu0 0.0
    %393 = vmatpush.msra.mxu0 0.0
    %394 = vmatpush.msra.mxu0 0.0
    %395 = vmatpush.msra.mxu0 0.0
    %396 = vmatpush.msra.mxu0 0.0
    %397 = vmatpush.msra.mxu0 0.0
    %398 = vmatpush.msra.mxu0 0.0
    %399 = vmatpush.msra.mxu0 %v279
    %400 = vmatpush.msra.mxu0 %v269
    %401 = vmatpush.msra.mxu0 %v259
    %402 = vmatpush.msra.mxu0 %v249
    %403 = vmatpush.msra.mxu0 %v239
    %404 = vmatpush.msra.mxu0 %v229
    %405 = vmatpush.msra.mxu0 %v219
    %406 = vmatpush.msra.mxu0 %v209
    %407 = vmatmul.f32.gmra.mxu0 %v289
    %v408 = vpop.f32.mrf.mxu0
    %v409 = vadd.f32 %v389, %v408
    %410 = vdwg.mxu0
    %411 = vmatpush.msra.mxu0 %v200
    %412 = vmatpush.msra.mxu0 %v190
    %413 = vmatpush.msra.mxu0 %v180
    %414 = vmatpush.msra.mxu0 %v170
    %415 = vmatpush.msra.mxu0 %v160
    %416 = vmatpush.msra.mxu0 %v150
    %417 = vmatpush.msra.mxu0 %v140
    %418 = vmatpush.msra.mxu0 %v130
    %419 = vmatpush.msra.mxu0 %v120
    %420 = vmatpush.msra.mxu0 %v110
    %421 = vmatpush.msra.mxu0 %v100
    %422 = vmatpush.msra.mxu0 %v90
    %423 = vmatpush.msra.mxu0 %v80
    %424 = vmatpush.msra.mxu0 %v70
    %425 = vmatpush.msra.mxu0 %v60
    %426 = vmatpush.msra.mxu0 %v50
    %427 = vmatmul.f32.gmra.mxu0 %v45
    %v428 = vpop.f32.mrf.mxu0
    %v429 = vadd.f32 0.0, %v428
    %430 = vdwg.mxu0
    %431 = vmatpush.msra.mxu0 0.0
    %432 = vmatpush.msra.mxu0 0.0
    %433 = vmatpush.msra.mxu0 0.0
    %434 = vmatpush.msra.mxu0 0.0
    %435 = vmatpush.msra.mxu0 0.0
    %436 = vmatpush.msra.mxu0 0.0
    %437 = vmatpush.msra.mxu0 0.0
    %438 = vmatpush.msra.mxu0 0.0
    %439 = vmatpush.msra.mxu0 %v280
    %440 = vmatpush.msra.mxu0 %v270
    %441 = vmatpush.msra.mxu0 %v260
    %442 = vmatpush.msra.mxu0 %v250
    %443 = vmatpush.msra.mxu0 %v240
    %444 = vmatpush.msra.mxu0 %v230
    %445 = vmatpush.msra.mxu0 %v220
    %446 = vmatpush.msra.mxu0 %v210
    %447 = vmatmul.f32.gmra.mxu0 %v289
    %v448 = vpop.f32.mrf.mxu0
    %v449 = vadd.f32 %v429, %v448
    %450 = vdwg.mxu0
    %451 = vmatpush.msra.mxu0 %v201
    %452 = vmatpush.msra.mxu0 %v191
    %453 = vmatpush.msra.mxu0 %v181
    %454 = vmatpush.msra.mxu0 %v171
    %455 = vmatpush.msra.mxu0 %v161
    %456 = vmatpush.msra.mxu0 %v151
    %457 = vmatpush.msra.mxu0 %v141
    %458 = vmatpush.msra.mxu0 %v131
    %459 = vmatpush.msra.mxu0 %v121
    %460 = vmatpush.msra.mxu0 %v111
    %461 = vmatpush.msra.mxu0 %v101
    %462 = vmatpush.msra.mxu0 %v91
    %463 = vmatpush.msra.mxu0 %v81
    %464 = vmatpush.msra.mxu0 %v71
    %465 = vmatpush.msra.mxu0 %v61
    %466 = vmatpush.msra.mxu0 %v51
    %467 = vmatmul.f32.gmra.mxu0 %v45
    %v468 = vpop.f32.mrf.mxu0
    %v469 = vadd.f32 0.0, %v468
    %470 = vdwg.mxu0
    %471 = vmatpush.msra.mxu0 0.0
    %472 = vmatpush.msra.mxu0 0.0
    %473 = vmatpush.msra.mxu0 0.0
    %474 = vmatpush.msra.mxu0 0.0
    %475 = vmatpush.msra.mxu0 0.0
    %476 = vmatpush.msra.mxu0 0.0
    %477 = vmatpush.msra.mxu0 0.0
    %478 = vmatpush.msra.mxu0 0.0
    %479 = vmatpush.msra.mxu0 %v281
    %480 = vmatpush.msra.mxu0 %v271
    %481 = vmatpush.msra.mxu0 %v261
    %482 = vmatpush.msra.mxu0 %v251
    %483 = vmatpush.msra.mxu0 %v241
    %484 = vmatpush.msra.mxu0 %v231
    %485 = vmatpush.msra.mxu0 %v221
    %486 = vmatpush.msra.mxu0 %v211
    %487 = vmatmul.f32.gmra.mxu0 %v289
    %v488 = vpop.f32.mrf.mxu0
    %v489 = vadd.f32 %v469, %v488
    %490 = vdwg.mxu0
    %491 = vmatpush.msra.mxu0 %v202
    %492 = vmatpush.msra.mxu0 %v192
    %493 = vmatpush.msra.mxu0 %v182
    %494 = vmatpush.msra.mxu0 %v172
    %495 = vmatpush.msra.mxu0 %v162
    %496 = vmatpush.msra.mxu0 %v152
    %497 = vmatpush.msra.mxu0 %v142
    %498 = vmatpush.msra.mxu0 %v132
    %499 = vmatpush.msra.mxu0 %v122
    %500 = vmatpush.msra.mxu0 %v112
    %501 = vmatpush.msra.mxu0 %v102
    %502 = vmatpush.msra.mxu0 %v92
    %503 = vmatpush.msra.mxu0 %v82
    %504 = vmatpush.msra.mxu0 %v72
    %505 = vmatpush.msra.mxu0 %v62
    %506 = vmatpush.msra.mxu0 %v52
    %507 = vmatmul.f32.gmra.mxu0 %v45
    %v508 = vpop.f32.mrf.mxu0
    %v509 = vadd.f32 0.0, %v508
    %510 = vdwg.mxu0
    %511 = vmatpush.msra.mxu0 0.0
    %512 = vmatpush.msra.mxu0 0.0
    %513 = vmatpush.msra.mxu0 0.0
    %514 = vmatpush.msra.mxu0 0.0
    %515 = vmatpush.msra.mxu0 0.0
    %516 = vmatpush.msra.mxu0 0.0
    %517 = vmatpush.msra.mxu0 0.0
    %518 = vmatpush.msra.mxu0 0.0
    %519 = vmatpush.msra.mxu0 %v282
    %520 = vmatpush.msra.mxu0 %v272
    %521 = vmatpush.msra.mxu0 %v262
    %522 = vmatpush.msra.mxu0 %v252
    %523 = vmatpush.msra.mxu0 %v242
    %524 = vmatpush.msra.mxu0 %v232
    %525 = vmatpush.msra.mxu0 %v222
    %526 = vmatpush.msra.mxu0 %v212
    %527 = vmatmul.f32.gmra.mxu0 %v289
    %v528 = vpop.f32.mrf.mxu0
    %v529 = vadd.f32 %v509, %v528
    %530 = vdwg.mxu0
    %531 = vmatpush.msra.mxu0 %v203
    %532 = vmatpush.msra.mxu0 %v193
    %533 = vmatpush.msra.mxu0 %v183
    %534 = vmatpush.msra.mxu0 %v173
    %535 = vmatpush.msra.mxu0 %v163
    %536 = vmatpush.msra.mxu0 %v153
    %537 = vmatpush.msra.mxu0 %v143
    %538 = vmatpush.msra.mxu0 %v133
    %539 = vmatpush.msra.mxu0 %v123
    %540 = vmatpush.msra.mxu0 %v113
    %541 = vmatpush.msra.mxu0 %v103
    %542 = vmatpush.msra.mxu0 %v93
    %543 = vmatpush.msra.mxu0 %v83
    %544 = vmatpush.msra.mxu0 %v73
    %545 = vmatpush.msra.mxu0 %v63
    %546 = vmatpush.msra.mxu0 %v53
    %547 = vmatmul.f32.gmra.mxu0 %v45
    %v548 = vpop.f32.mrf.mxu0
    %v549 = vadd.f32 0.0, %v548
    %550 = vdwg.mxu0
    %551 = vmatpush.msra.mxu0 0.0
    %552 = vmatpush.msra.mxu0 0.0
    %553 = vmatpush.msra.mxu0 0.0
    %554 = vmatpush.msra.mxu0 0.0
    %555 = vmatpush.msra.mxu0 0.0
    %556 = vmatpush.msra.mxu0 0.0
    %557 = vmatpush.msra.mxu0 0.0
    %558 = vmatpush.msra.mxu0 0.0
    %559 = vmatpush.msra.mxu0 %v283
    %560 = vmatpush.msra.mxu0 %v273
    %561 = vmatpush.msra.mxu0 %v263
    %562 = vmatpush.msra.mxu0 %v253
    %563 = vmatpush.msra.mxu0 %v243
    %564 = vmatpush.msra.mxu0 %v233
    %565 = vmatpush.msra.mxu0 %v223
    %566 = vmatpush.msra.mxu0 %v213
    %567 = vmatmul.f32.gmra.mxu0 %v289
    %v568 = vpop.f32.mrf.mxu0
    %v569 = vadd.f32 %v549, %v568
    %570 = vdwg.mxu0
    %571 = vmatpush.msra.mxu0 %v204
    %572 = vmatpush.msra.mxu0 %v194
    %573 = vmatpush.msra.mxu0 %v184
    %574 = vmatpush.msra.mxu0 %v174
    %575 = vmatpush.msra.mxu0 %v164
    %576 = vmatpush.msra.mxu0 %v154
    %577 = vmatpush.msra.mxu0 %v144
    %578 = vmatpush.msra.mxu0 %v134
    %579 = vmatpush.msra.mxu0 %v124
    %580 = vmatpush.msra.mxu0 %v114
    %581 = vmatpush.msra.mxu0 %v104
    %582 = vmatpush.msra.mxu0 %v94
    %583 = vmatpush.msra.mxu0 %v84
    %584 = vmatpush.msra.mxu0 %v74
    %585 = vmatpush.msra.mxu0 %v64
    %586 = vmatpush.msra.mxu0 %v54
    %587 = vmatmul.f32.gmra.mxu0 %v45
    %v588 = vpop.f32.mrf.mxu0
    %v589 = vadd.f32 0.0, %v588
    %590 = vdwg.mxu0
    %591 = vmatpush.msra.mxu0 0.0
    %592 = vmatpush.msra.mxu0 0.0
    %593 = vmatpush.msra.mxu0 0.0
    %594 = vmatpush.msra.mxu0 0.0
    %595 = vmatpush.msra.mxu0 0.0
    %596 = vmatpush.msra.mxu0 0.0
    %597 = vmatpush.msra.mxu0 0.0
    %598 = vmatpush.msra.mxu0 0.0
    %599 = vmatpush.msra.mxu0 %v284
    %600 = vmatpush.msra.mxu0 %v274
    %601 = vmatpush.msra.mxu0 %v264
    %602 = vmatpush.msra.mxu0 %v254
    %603 = vmatpush.msra.mxu0 %v244
    %604 = vmatpush.msra.mxu0 %v234
    %605 = vmatpush.msra.mxu0 %v224
    %606 = vmatpush.msra.mxu0 %v214
    %607 = vmatmul.f32.gmra.mxu0 %v289
    %v608 = vpop.f32.mrf.mxu0
    %v609 = vadd.f32 %v589, %v608
    %610 = vdwg.mxu0
    %611 = vmatpush.msra.mxu0 %v205
    %612 = vmatpush.msra.mxu0 %v195
    %613 = vmatpush.msra.mxu0 %v185
    %614 = vmatpush.msra.mxu0 %v175
    %615 = vmatpush.msra.mxu0 %v165
    %616 = vmatpush.msra.mxu0 %v155
    %617 = vmatpush.msra.mxu0 %v145
    %618 = vmatpush.msra.mxu0 %v135
    %619 = vmatpush.msra.mxu0 %v125
    %620 = vmatpush.msra.mxu0 %v115
    %621 = vmatpush.msra.mxu0 %v105
    %622 = vmatpush.msra.mxu0 %v95
    %623 = vmatpush.msra.mxu0 %v85
    %624 = vmatpush.msra.mxu0 %v75
    %625 = vmatpush.msra.mxu0 %v65
    %626 = vmatpush.msra.mxu0 %v55
    %627 = vmatmul.f32.gmra.mxu0 %v45
    %v628 = vpop.f32.mrf.mxu0
    %v629 = vadd.f32 0.0, %v628
    %630 = vdwg.mxu0
    %631 = vmatpush.msra.mxu0 0.0
    %632 = vmatpush.msra.mxu0 0.0
    %633 = vmatpush.msra.mxu0 0.0
    %634 = vmatpush.msra.mxu0 0.0
    %635 = vmatpush.msra.mxu0 0.0
    %636 = vmatpush.msra.mxu0 0.0
    %637 = vmatpush.msra.mxu0 0.0
    %638 = vmatpush.msra.mxu0 0.0
    %639 = vmatpush.msra.mxu0 %v285
    %640 = vmatpush.msra.mxu0 %v275
    %641 = vmatpush.msra.mxu0 %v265
    %642 = vmatpush.msra.mxu0 %v255
    %643 = vmatpush.msra.mxu0 %v245
    %644 = vmatpush.msra.mxu0 %v235
    %645 = vmatpush.msra.mxu0 %v225
    %646 = vmatpush.msra.mxu0 %v215
    %647 = vmatmul.f32.gmra.mxu0 %v289
    %v648 = vpop.f32.mrf.mxu0
    %v649 = vadd.f32 %v629, %v648
    %650 = vdwg.mxu0
    %651 = vmatpush.msra.mxu0 %v206
    %652 = vmatpush.msra.mxu0 %v196
    %653 = vmatpush.msra.mxu0 %v186
    %654 = vmatpush.msra.mxu0 %v176
    %655 = vmatpush.msra.mxu0 %v166
    %656 = vmatpush.msra.mxu0 %v156
    %657 = vmatpush.msra.mxu0 %v146
    %658 = vmatpush.msra.mxu0 %v136
    %659 = vmatpush.msra.mxu0 %v126
    %660 = vmatpush.msra.mxu0 %v116
    %661 = vmatpush.msra.mxu0 %v106
    %662 = vmatpush.msra.mxu0 %v96
    %663 = vmatpush.msra.mxu0 %v86
    %664 = vmatpush.msra.mxu0 %v76
    %665 = vmatpush.msra.mxu0 %v66
    %666 = vmatpush.msra.mxu0 %v56
    %667 = vmatmul.f32.gmra.mxu0 %v45
    %v668 = vpop.f32.mrf.mxu0
    %v669 = vadd.f32 0.0, %v668
    %670 = vdwg.mxu0
    %671 = vmatpush.msra.mxu0 0.0
    %672 = vmatpush.msra.mxu0 0.0
    %673 = vmatpush.msra.mxu0 0.0
    %674 = vmatpush.msra.mxu0 0.0
    %675 = vmatpush.msra.mxu0 0.0
    %676 = vmatpush.msra.mxu0 0.0
    %677 = vmatpush.msra.mxu0 0.0
    %678 = vmatpush.msra.mxu0 0.0
    %679 = vmatpush.msra.mxu0 %v286
    %680 = vmatpush.msra.mxu0 %v276
    %681 = vmatpush.msra.mxu0 %v266
    %682 = vmatpush.msra.mxu0 %v256
    %683 = vmatpush.msra.mxu0 %v246
    %684 = vmatpush.msra.mxu0 %v236
    %685 = vmatpush.msra.mxu0 %v226
    %686 = vmatpush.msra.mxu0 %v216
    %687 = vmatmul.f32.gmra.mxu0 %v289
    %v688 = vpop.f32.mrf.mxu0
    %v689 = vadd.f32 %v669, %v688
    %690 = vdwg.mxu0
    %v691 = vmax.f32 %v329, %v369
    %v692 = vmax.f32 %v691, %v409
    %v693 = vmax.f32 %v692, %v449
    %v694 = vmax.f32 %v693, %v489
    %v695 = vmax.f32 %v694, %v529
    %v696 = vmax.f32 %v695, %v569
    %v697 = vmax.f32 %v696, %v609
    %v698 = vmax.f32 %v697, %v649
    %v699 = vmax.f32 %v698, %v689
    %v700 = vld [vmem:[%s2] sm:$0x1]
    %v702 = vperm.slane %v700, 0
    %v704 = vadd.f32 %v699, %v702
    %v705 = vmax.f32 %v704, 0.0
    %706 = vst [vmem:[#allocation7] sm:$0xff] %v705
    // Predicated region
    $region22: #{tpu_custom_call.1} parent=1 // pred_check
      _
    $region23: #{tpu_custom_call.1} parent=1 // pred_check_branch
      %708 = sbr.rel (0) target = $region25
    $region24: #{tpu_custom_call.1} parent=1 // pred_region
      %710 = vsyncadd [#allocation4], 0
      %s712 = sshll.u32 [#allocation7], 4
      %s713 = int_to_ptr.vmem [resolvable:$true] %s712
      %s714 = sshll.u32 %s3, 4
      %s715 = int_to_ptr.hbm [resolvable:$true] %s714
      %717 = dma.vmem_to_hbm [thread:$0]  %s713, 128, %s715, [#allocation4]
    $region25: #{tpu_custom_call.1} parent=1 // pred_fallthru
      _
    // Predicated region
    $region26: #{tpu_custom_call.1} parent=1 // pred_check
      _
    $region27: #{tpu_custom_call.1} parent=1 // pred_check_branch
      %719 = sbr.rel (0) target = $region29
    $region28: #{tpu_custom_call.1} parent=1 // pred_region
      %721 = dma.done [#allocation4], 128
    $region29: #{tpu_custom_call.1} parent=1 // pred_fallthru
      _
    %722 = vsyncpa [#allocation3], 1
    %723 = vsyncpa [#allocation6], 1
    %724 = vsyncpa [#allocation4], 1

</llo_original>
